<compile_context>
chip_gen: v5e
topology: v5e:2x2
jax: 0.10.0
libtpu: 0.0.40
codegen_flags: <defaults>
</compile_context>

<pallas_src>
import math

import jax
import jax.numpy as jnp
import numpy as np
from jax.experimental import pallas as pl
from jax.experimental.pallas import tpu as pltpu

_EPS = 1e-5


def _make_resblock_kernel(B, L, Cin, Cout, has_proj, eps=_EPS):
    """Single-invocation kernel: all operands are small and fully VMEM-resident."""
    M = B * L
    inv_n = 1.0 / float(M)

    def bn(h, g_ref, b_ref):
        # Training-mode BatchNorm over (batch, length): single-pass biased variance + eps,
        # matching a freshly constructed nn.BatchNorm1d in train mode.
        mean = h.sum(axis=0, keepdims=True) * inv_n                      # (1, C)  E[x]
        ex2 = jnp.square(h).sum(axis=0, keepdims=True) * inv_n           # (1, C)  E[x^2]
        var = jnp.maximum(ex2 - jnp.square(mean), 0.0)                   # biased variance
        scale = g_ref[...] * jax.lax.rsqrt(var + eps)
        shift = b_ref[...] - mean * scale
        return h * scale + shift                                         # single FMA apply

    def kernel(*refs):
        if has_proj:
            (x_ref, w1_ref, g1_ref, b1_ref, w2_ref, g2_ref, b2_ref,
             wsc_ref, gsc_ref, bsc_ref, out_ref) = refs
        else:
            (x_ref, w1_ref, g1_ref, b1_ref, w2_ref, g2_ref, b2_ref, out_ref) = refs

        # In-kernel batch-boundary masks (True = neighbour row belongs to the same batch item).
        pos = jax.lax.broadcasted_iota(jnp.int32, (M, 1), 0) % L
        m_up = pos != 0            # row l-1 valid
        m_dn = pos != (L - 1)      # row l+1 valid

        def conv3(slab, w_ref):
            # slab: (M, C) f32.  w_ref: (3*C, Cout) bf16, tap-major rows [k=0 | k=1 | k=2].
            # Build the halo taps in-register, concat along the contraction axis, one dot.
            C = slab.shape[1]
            z = jnp.zeros((1, C), slab.dtype)
            up = jnp.concatenate([z, slab[:-1, :]], axis=0)              # in[l-1]
            dn = jnp.concatenate([slab[1:, :], z], axis=0)               # in[l+1]
            up = jnp.where(m_up, up, jnp.zeros_like(up))
            dn = jnp.where(m_dn, dn, jnp.zeros_like(dn))
            lhs = jnp.concatenate([up, slab, dn], axis=1)                # (M, 3*C)
            return jnp.dot(lhs.astype(jnp.bfloat16), w_ref[...],
                           preferred_element_type=jnp.float32)           # (M, Cout) f32

        x = x_ref[...]                                                   # (M, Cin) f32

        # conv1 -> bn1 -> relu
        h1 = jnp.maximum(bn(conv3(x, w1_ref), g1_ref, b1_ref), 0.0)

        # conv2 -> bn2
        h2 = bn(conv3(h1, w2_ref), g2_ref, b2_ref)

        # shortcut: 1x1 conv + bn if channel counts differ, else identity
        if has_proj:
            sc = jnp.dot(x.astype(jnp.bfloat16), wsc_ref[...],
                         preferred_element_type=jnp.float32)
            sc = bn(sc, gsc_ref, bsc_ref)
        else:
            sc = x

        # residual add + final relu, one store
        out_ref[...] = jnp.maximum(h2 + sc, 0.0)

    return kernel


@jax.jit
def residual_block_forward(x_ncl, params):
    """x_ncl: (B, C_in, L) float32 in PyTorch NCL convention. Returns (B, C_out, L)."""
    B, Cin, L = x_ncl.shape
    Cout = params["w1"].shape[0]
    has_proj = "wsc" in params
    M = B * L

    # TODO(synk): keep the surrounding model channels-last to drop these NCL<->NLC transposes
    # (each is an extra XLA HBM round trip) from the hot path.
    x_mc = jnp.transpose(x_ncl, (0, 2, 1)).reshape(M, Cin).astype(jnp.float32)

    def prep_w(w):
        # (Cout, Cin, 3) -> (3*Cin, Cout) bf16, tap-major rows, for the single K-concat matmul.
        cout, cin, k = w.shape
        return jnp.transpose(w, (2, 1, 0)).reshape(k * cin, cout).astype(jnp.bfloat16)

    def prep_v(v):
        return v.astype(jnp.float32)[None, :]

    args = [x_mc,
            prep_w(params["w1"]), prep_v(params["g1"]), prep_v(params["b1"]),
            prep_w(params["w2"]), prep_v(params["g2"]), prep_v(params["b2"])]
    if has_proj:
        wsc = jnp.transpose(params["wsc"][:, :, 0], (1, 0)).astype(jnp.bfloat16)   # (Cin, Cout)
        args += [wsc, prep_v(params["gsc"]), prep_v(params["bsc"])]

    n_bn = 3 if has_proj else 2
    flops = 2 * M * (3 * Cin) * Cout + 2 * M * (3 * Cout) * Cout + 14 * M * Cout
    if has_proj:
        flops += 2 * M * Cin * Cout
    bytes_accessed = 4 * M * Cin + 4 * M * Cout + sum(
        int(a.size) * a.dtype.itemsize for a in args[1:])
    cost = pl.CostEstimate(flops=int(flops), transcendentals=n_bn * Cout,
                           bytes_accessed=int(bytes_accessed))

    kernel = _make_resblock_kernel(B, L, Cin, Cout, has_proj)
    vmem = pl.BlockSpec(memory_space=pltpu.MemorySpace.VMEM)

    # TODO(synk): for large B*L this single-block design should become a gridded pipeline
    # (>=256-row M tiles, pl.Buffered input spec, two-pass BN with pl.when init/finalize on an
    # "arbitrary" reduction axis, "parallel" tile axes so v7x's second TensorCore is used and
    # the 64 MiB VMEM budget is respected); unnecessary at these toy shapes.
    out_mc = pl.pallas_call(
        kernel,
        out_shape=jax.ShapeDtypeStruct((M, Cout), jnp.float32),
        in_specs=[vmem] * len(args),
        out_specs=vmem,
        compiler_params=pltpu.CompilerParams(vmem_limit_bytes=32 * 1024 * 1024),
        cost_estimate=cost,
    )(*args)

    return jnp.transpose(out_mc.reshape(B, L, Cout), (0, 2, 1))           # back to (B, Cout, L)


# -------------------- deterministic parameter init + pure-JAX reference --------------------

def init_params(key, cin, cout, k=3):
    ks = jax.random.split(key, 9)
    p = {
        "w1": jax.random.normal(ks[0], (cout, cin, k), jnp.float32) / math.sqrt(cin * k),
        "g1": 1.0 + 0.1 * jax.random.normal(ks[1], (cout,), jnp.float32),
        "b1": 0.1 * jax.random.normal(ks[2], (cout,), jnp.float32),
        "w2": jax.random.normal(ks[3], (cout, cout, k), jnp.float32) / math.sqrt(cout * k),
        "g2": 1.0 + 0.1 * jax.random.normal(ks[4], (cout,), jnp.float32),
        "b2": 0.1 * jax.random.normal(ks[5], (cout,), jnp.float32),
    }
    if cin != cout:
        p["wsc"] = jax.random.normal(ks[6], (cout, cin, 1), jnp.float32) / math.sqrt(cin)
        p["gsc"] = 1.0 + 0.1 * jax.random.normal(ks[7], (cout,), jnp.float32)
        p["bsc"] = 0.1 * jax.random.normal(ks[8], (cout,), jnp.float32)
    return p


def ref_forward(x, p):
    """Pure-JAX mirror of the PyTorch forward (training-mode BN), NCL layout."""
    def conv(x, w, pad):
        return jax.lax.conv_general_dilated(
            x, w, window_strides=(1,), padding=[(pad, pad)],
            dimension_numbers=("NCH", "OIH", "NCH"))

    def bn(y, g, b):
        m = jnp.mean(y, axis=(0, 2), keepdims=True)
        v = jnp.mean(jnp.square(y - m), axis=(0, 2), keepdims=True)
        return (y - m) * jax.lax.rsqrt(v + _EPS) * g[None, :, None] + b[None, :, None]

    shortcut = bn(conv(x, p["wsc"], 0), p["gsc"], p["bsc"]) if "wsc" in p else x
    h = jax.nn.relu(bn(conv(x, p["w1"], 1), p["g1"], p["b1"]))
    h = bn(conv(h, p["w2"], 1), p["g2"], p["b2"])
    return jax.nn.relu(h + shortcut)


if __name__ == "__main__":
    key = jax.random.PRNGKey(0)
    kx, kp1, kp2 = jax.random.split(key, 3)

    B, Cin, Cout, L = 2, 4, 8, 16

    # Case 1: in_channels != out_channels (projection shortcut)
    x = jax.random.normal(kx, (B, Cin, L), jnp.float32)
    params = init_params(kp1, Cin, Cout)
    out = jax.block_until_ready(residual_block_forward(x, params))
    np.testing.assert_allclose(np.asarray(out), np.asarray(ref_forward(x, params)),
                               rtol=5e-2, atol=5e-2)

    # Case 2: in_channels == out_channels (identity shortcut)
    params_id = init_params(kp2, Cout, Cout)
    x2 = jax.random.normal(kx, (B, Cout, L), jnp.float32)
    out2 = jax.block_until_ready(residual_block_forward(x2, params_id))
    np.testing.assert_allclose(np.asarray(out2), np.asarray(ref_forward(x2, params_id)),
                               rtol=5e-2, atol=5e-2)

    print("KERNEL_OK")
</pallas_src>

<mosaic_0001>
module attributes {stable_mosaic.version = 11 : i64} {
  func.func @kernel(%arg0: memref<32x4xf32, #tpu.memory_space<vmem>>, %arg1: memref<12x8xbf16, #tpu.memory_space<vmem>>, %arg2: memref<1x8xf32, #tpu.memory_space<vmem>>, %arg3: memref<1x8xf32, #tpu.memory_space<vmem>>, %arg4: memref<24x8xbf16, #tpu.memory_space<vmem>>, %arg5: memref<1x8xf32, #tpu.memory_space<vmem>>, %arg6: memref<1x8xf32, #tpu.memory_space<vmem>>, %arg7: memref<4x8xbf16, #tpu.memory_space<vmem>>, %arg8: memref<1x8xf32, #tpu.memory_space<vmem>>, %arg9: memref<1x8xf32, #tpu.memory_space<vmem>>, %arg10: memref<32x8xf32, #tpu.memory_space<vmem>>) attributes {dimension_semantics = [], scalar_prefetch = 0 : i64, scratch_operands = 0 : i64, tpu.core_type = #tpu.core_type<tc>} {
    %0 = tpu.iota {dimensions = array<i32: 0>} : vector<32x1xi32>
    %c16_i32 = arith.constant 16 : i32
    %c0_i32 = arith.constant 0 : i32
    %1 = arith.cmpi eq, %c16_i32, %c0_i32 : i32
    %c1_i32 = arith.constant 1 : i32
    %2 = arith.select %1, %c1_i32, %c16_i32 : i32
    %3 = vector.broadcast %2 : i32 to vector<32x1xi32>
    %4 = arith.remsi %0, %3 : vector<32x1xi32>
    %c0_i32_0 = arith.constant 0 : i32
    %5 = vector.broadcast %c0_i32_0 : i32 to vector<32x1xi32>
    %6 = arith.cmpi ne, %4, %5 : vector<32x1xi32>
    %c0_i32_1 = arith.constant 0 : i32
    %7 = vector.broadcast %c0_i32_1 : i32 to vector<32x1xi32>
    %8 = arith.cmpi slt, %4, %7 : vector<32x1xi32>
    %c0_i32_2 = arith.constant 0 : i32
    %9 = arith.cmpi slt, %2, %c0_i32_2 : i32
    %10 = vector.broadcast %9 : i1 to vector<32x1xi1>
    %11 = vector.broadcast %10 : vector<32x1xi1> to vector<32x1xi1>
    %12 = arith.xori %8, %11 : vector<32x1xi1>
    %13 = arith.andi %12, %6 : vector<32x1xi1>
    %14 = vector.broadcast %2 : i32 to vector<32x1xi32>
    %15 = arith.addi %4, %14 : vector<32x1xi32>
    %16 = arith.select %13, %15, %4 : vector<32x1xi1>, vector<32x1xi32>
    %c0_i32_3 = arith.constant 0 : i32
    %17 = vector.broadcast %c0_i32_3 : i32 to vector<32x1xi32>
    %18 = arith.cmpi ne, %16, %17 : vector<32x1xi32>
    %c15_i32 = arith.constant 15 : i32
    %19 = vector.broadcast %c15_i32 : i32 to vector<32x1xi32>
    %20 = arith.cmpi ne, %16, %19 : vector<32x1xi32>
    %c0 = arith.constant 0 : index
    %c0_4 = arith.constant 0 : index
    %21 = vector.load %arg0[%c0, %c0_4] : memref<32x4xf32, #tpu.memory_space<vmem>>, vector<32x4xf32>
    %cst = arith.constant 0.000000e+00 : f32
    %22 = vector.broadcast %cst : f32 to vector<1x4xf32>
    %23 = vector.extract_strided_slice %21 {offsets = [0, 0], sizes = [31, 4], strides = [1, 1]} : vector<32x4xf32> to vector<31x4xf32>
    %24 = tpu.concatenate %22, %23 in 0 : vector<1x4xf32>, vector<31x4xf32> -> vector<32x4xf32>
    %25 = vector.extract_strided_slice %21 {offsets = [1, 0], sizes = [31, 4], strides = [1, 1]} : vector<32x4xf32> to vector<31x4xf32>
    %26 = tpu.concatenate %25, %22 in 0 : vector<31x4xf32>, vector<1x4xf32> -> vector<32x4xf32>
    %cst_5 = arith.constant 0.000000e+00 : f32
    %27 = vector.broadcast %cst_5 : f32 to vector<32x4xf32>
    %28 = vector.shape_cast %18 : vector<32x1xi1> to vector<32x1xi1>
    %29 = vector.broadcast %28 : vector<32x1xi1> to vector<32x4xi1>
    %30 = arith.select %29, %24, %27 : vector<32x4xi1>, vector<32x4xf32>
    %cst_6 = arith.constant 0.000000e+00 : f32
    %31 = vector.broadcast %cst_6 : f32 to vector<32x4xf32>
    %32 = vector.shape_cast %20 : vector<32x1xi1> to vector<32x1xi1>
    %33 = vector.broadcast %32 : vector<32x1xi1> to vector<32x4xi1>
    %34 = arith.select %33, %26, %31 : vector<32x4xi1>, vector<32x4xf32>
    %35 = tpu.concatenate %30, %21, %34 in 1 : vector<32x4xf32>, vector<32x4xf32>, vector<32x4xf32> -> vector<32x12xf32>
    %36 = arith.truncf %35 : vector<32x12xf32> to vector<32x12xbf16>
    %c0_7 = arith.constant 0 : index
    %c0_8 = arith.constant 0 : index
    %37 = vector.load %arg1[%c0_7, %c0_8] : memref<12x8xbf16, #tpu.memory_space<vmem>>, vector<12x8xbf16>
    %cst_9 = arith.constant dense<0.000000e+00> : vector<32x8xf32>
    %38 = tpu.matmul %36, %37, %cst_9 {dimension_numbers = #tpu.dot_dimension_numbers<[1], [0], [0], [1], [0, 0, 1, 1], [], []>} : vector<32x12xbf16>, vector<12x8xbf16>, vector<32x8xf32> -> vector<32x8xf32>
    %cst_10 = arith.constant dense<0.000000e+00> : vector<8xf32>
    %39 = vector.multi_reduction <add>, %38, %cst_10 [0] : vector<32x8xf32> to vector<8xf32>
    %40 = vector.shape_cast %39 : vector<8xf32> to vector<1x8xf32>
    %cst_11 = arith.constant 3.125000e-02 : f32
    %41 = vector.broadcast %cst_11 : f32 to vector<1x8xf32>
    %42 = arith.mulf %40, %41 : vector<1x8xf32>
    %43 = arith.mulf %38, %38 : vector<32x8xf32>
    %cst_12 = arith.constant dense<0.000000e+00> : vector<8xf32>
    %44 = vector.multi_reduction <add>, %43, %cst_12 [0] : vector<32x8xf32> to vector<8xf32>
    %45 = vector.shape_cast %44 : vector<8xf32> to vector<1x8xf32>
    %cst_13 = arith.constant 3.125000e-02 : f32
    %46 = vector.broadcast %cst_13 : f32 to vector<1x8xf32>
    %47 = arith.mulf %45, %46 : vector<1x8xf32>
    %48 = arith.mulf %42, %42 : vector<1x8xf32>
    %49 = arith.subf %47, %48 : vector<1x8xf32>
    %cst_14 = arith.constant 0.000000e+00 : f32
    %50 = vector.broadcast %cst_14 : f32 to vector<1x8xf32>
    %51 = arith.maximumf %49, %50 : vector<1x8xf32>
    %c0_15 = arith.constant 0 : index
    %c0_16 = arith.constant 0 : index
    %52 = vector.load %arg2[%c0_15, %c0_16] : memref<1x8xf32, #tpu.memory_space<vmem>>, vector<1x8xf32>
    %cst_17 = arith.constant 9.99999974E-6 : f32
    %53 = vector.broadcast %cst_17 : f32 to vector<1x8xf32>
    %54 = arith.addf %51, %53 : vector<1x8xf32>
    %55 = math.rsqrt %54 : vector<1x8xf32>
    %56 = arith.mulf %52, %55 : vector<1x8xf32>
    %c0_18 = arith.constant 0 : index
    %c0_19 = arith.constant 0 : index
    %57 = vector.load %arg3[%c0_18, %c0_19] : memref<1x8xf32, #tpu.memory_space<vmem>>, vector<1x8xf32>
    %58 = arith.mulf %42, %56 : vector<1x8xf32>
    %59 = arith.subf %57, %58 : vector<1x8xf32>
    %60 = vector.broadcast %56 : vector<1x8xf32> to vector<32x8xf32>
    %61 = arith.mulf %38, %60 : vector<32x8xf32>
    %62 = vector.broadcast %59 : vector<1x8xf32> to vector<32x8xf32>
    %63 = arith.addf %61, %62 : vector<32x8xf32>
    %cst_20 = arith.constant 0.000000e+00 : f32
    %64 = vector.broadcast %cst_20 : f32 to vector<32x8xf32>
    %65 = arith.maximumf %63, %64 : vector<32x8xf32>
    %cst_21 = arith.constant 0.000000e+00 : f32
    %66 = vector.broadcast %cst_21 : f32 to vector<1x8xf32>
    %67 = vector.extract_strided_slice %65 {offsets = [0, 0], sizes = [31, 8], strides = [1, 1]} : vector<32x8xf32> to vector<31x8xf32>
    %68 = tpu.concatenate %66, %67 in 0 : vector<1x8xf32>, vector<31x8xf32> -> vector<32x8xf32>
    %69 = vector.extract_strided_slice %65 {offsets = [1, 0], sizes = [31, 8], strides = [1, 1]} : vector<32x8xf32> to vector<31x8xf32>
    %70 = tpu.concatenate %69, %66 in 0 : vector<31x8xf32>, vector<1x8xf32> -> vector<32x8xf32>
    %cst_22 = arith.constant 0.000000e+00 : f32
    %71 = vector.broadcast %cst_22 : f32 to vector<32x8xf32>
    %72 = vector.shape_cast %18 : vector<32x1xi1> to vector<32x1xi1>
    %73 = vector.broadcast %72 : vector<32x1xi1> to vector<32x8xi1>
    %74 = arith.select %73, %68, %71 : vector<32x8xi1>, vector<32x8xf32>
    %cst_23 = arith.constant 0.000000e+00 : f32
    %75 = vector.broadcast %cst_23 : f32 to vector<32x8xf32>
    %76 = vector.shape_cast %20 : vector<32x1xi1> to vector<32x1xi1>
    %77 = vector.broadcast %76 : vector<32x1xi1> to vector<32x8xi1>
    %78 = arith.select %77, %70, %75 : vector<32x8xi1>, vector<32x8xf32>
    %79 = tpu.concatenate %74, %65, %78 in 1 : vector<32x8xf32>, vector<32x8xf32>, vector<32x8xf32> -> vector<32x24xf32>
    %80 = arith.truncf %79 : vector<32x24xf32> to vector<32x24xbf16>
    %c0_24 = arith.constant 0 : index
    %c0_25 = arith.constant 0 : index
    %81 = vector.load %arg4[%c0_24, %c0_25] : memref<24x8xbf16, #tpu.memory_space<vmem>>, vector<24x8xbf16>
    %cst_26 = arith.constant dense<0.000000e+00> : vector<32x8xf32>
    %82 = tpu.matmul %80, %81, %cst_26 {dimension_numbers = #tpu.dot_dimension_numbers<[1], [0], [0], [1], [0, 0, 1, 1], [], []>} : vector<32x24xbf16>, vector<24x8xbf16>, vector<32x8xf32> -> vector<32x8xf32>
    %cst_27 = arith.constant dense<0.000000e+00> : vector<8xf32>
    %83 = vector.multi_reduction <add>, %82, %cst_27 [0] : vector<32x8xf32> to vector<8xf32>
    %84 = vector.shape_cast %83 : vector<8xf32> to vector<1x8xf32>
    %cst_28 = arith.constant 3.125000e-02 : f32
    %85 = vector.broadcast %cst_28 : f32 to vector<1x8xf32>
    %86 = arith.mulf %84, %85 : vector<1x8xf32>
    %87 = arith.mulf %82, %82 : vector<32x8xf32>
    %cst_29 = arith.constant dense<0.000000e+00> : vector<8xf32>
    %88 = vector.multi_reduction <add>, %87, %cst_29 [0] : vector<32x8xf32> to vector<8xf32>
    %89 = vector.shape_cast %88 : vector<8xf32> to vector<1x8xf32>
    %cst_30 = arith.constant 3.125000e-02 : f32
    %90 = vector.broadcast %cst_30 : f32 to vector<1x8xf32>
    %91 = arith.mulf %89, %90 : vector<1x8xf32>
    %92 = arith.mulf %86, %86 : vector<1x8xf32>
    %93 = arith.subf %91, %92 : vector<1x8xf32>
    %cst_31 = arith.constant 0.000000e+00 : f32
    %94 = vector.broadcast %cst_31 : f32 to vector<1x8xf32>
    %95 = arith.maximumf %93, %94 : vector<1x8xf32>
    %c0_32 = arith.constant 0 : index
    %c0_33 = arith.constant 0 : index
    %96 = vector.load %arg5[%c0_32, %c0_33] : memref<1x8xf32, #tpu.memory_space<vmem>>, vector<1x8xf32>
    %cst_34 = arith.constant 9.99999974E-6 : f32
    %97 = vector.broadcast %cst_34 : f32 to vector<1x8xf32>
    %98 = arith.addf %95, %97 : vector<1x8xf32>
    %99 = math.rsqrt %98 : vector<1x8xf32>
    %100 = arith.mulf %96, %99 : vector<1x8xf32>
    %c0_35 = arith.constant 0 : index
    %c0_36 = arith.constant 0 : index
    %101 = vector.load %arg6[%c0_35, %c0_36] : memref<1x8xf32, #tpu.memory_space<vmem>>, vector<1x8xf32>
    %102 = arith.mulf %86, %100 : vector<1x8xf32>
    %103 = arith.subf %101, %102 : vector<1x8xf32>
    %104 = vector.broadcast %100 : vector<1x8xf32> to vector<32x8xf32>
    %105 = arith.mulf %82, %104 : vector<32x8xf32>
    %106 = vector.broadcast %103 : vector<1x8xf32> to vector<32x8xf32>
    %107 = arith.addf %105, %106 : vector<32x8xf32>
    %108 = arith.truncf %21 : vector<32x4xf32> to vector<32x4xbf16>
    %c0_37 = arith.constant 0 : index
    %c0_38 = arith.constant 0 : index
    %109 = vector.load %arg7[%c0_37, %c0_38] : memref<4x8xbf16, #tpu.memory_space<vmem>>, vector<4x8xbf16>
    %cst_39 = arith.constant dense<0.000000e+00> : vector<32x8xf32>
    %110 = tpu.matmul %108, %109, %cst_39 {dimension_numbers = #tpu.dot_dimension_numbers<[1], [0], [0], [1], [0, 0, 1, 1], [], []>} : vector<32x4xbf16>, vector<4x8xbf16>, vector<32x8xf32> -> vector<32x8xf32>
    %cst_40 = arith.constant dense<0.000000e+00> : vector<8xf32>
    %111 = vector.multi_reduction <add>, %110, %cst_40 [0] : vector<32x8xf32> to vector<8xf32>
    %112 = vector.shape_cast %111 : vector<8xf32> to vector<1x8xf32>
    %cst_41 = arith.constant 3.125000e-02 : f32
    %113 = vector.broadcast %cst_41 : f32 to vector<1x8xf32>
    %114 = arith.mulf %112, %113 : vector<1x8xf32>
    %115 = arith.mulf %110, %110 : vector<32x8xf32>
    %cst_42 = arith.constant dense<0.000000e+00> : vector<8xf32>
    %116 = vector.multi_reduction <add>, %115, %cst_42 [0] : vector<32x8xf32> to vector<8xf32>
    %117 = vector.shape_cast %116 : vector<8xf32> to vector<1x8xf32>
    %cst_43 = arith.constant 3.125000e-02 : f32
    %118 = vector.broadcast %cst_43 : f32 to vector<1x8xf32>
    %119 = arith.mulf %117, %118 : vector<1x8xf32>
    %120 = arith.mulf %114, %114 : vector<1x8xf32>
    %121 = arith.subf %119, %120 : vector<1x8xf32>
    %cst_44 = arith.constant 0.000000e+00 : f32
    %122 = vector.broadcast %cst_44 : f32 to vector<1x8xf32>
    %123 = arith.maximumf %121, %122 : vector<1x8xf32>
    %c0_45 = arith.constant 0 : index
    %c0_46 = arith.constant 0 : index
    %124 = vector.load %arg8[%c0_45, %c0_46] : memref<1x8xf32, #tpu.memory_space<vmem>>, vector<1x8xf32>
    %cst_47 = arith.constant 9.99999974E-6 : f32
    %125 = vector.broadcast %cst_47 : f32 to vector<1x8xf32>
    %126 = arith.addf %123, %125 : vector<1x8xf32>
    %127 = math.rsqrt %126 : vector<1x8xf32>
    %128 = arith.mulf %124, %127 : vector<1x8xf32>
    %c0_48 = arith.constant 0 : index
    %c0_49 = arith.constant 0 : index
    %129 = vector.load %arg9[%c0_48, %c0_49] : memref<1x8xf32, #tpu.memory_space<vmem>>, vector<1x8xf32>
    %130 = arith.mulf %114, %128 : vector<1x8xf32>
    %131 = arith.subf %129, %130 : vector<1x8xf32>
    %132 = vector.broadcast %128 : vector<1x8xf32> to vector<32x8xf32>
    %133 = arith.mulf %110, %132 : vector<32x8xf32>
    %134 = vector.broadcast %131 : vector<1x8xf32> to vector<32x8xf32>
    %135 = arith.addf %133, %134 : vector<32x8xf32>
    %136 = arith.addf %107, %135 : vector<32x8xf32>
    %cst_50 = arith.constant 0.000000e+00 : f32
    %137 = vector.broadcast %cst_50 : f32 to vector<32x8xf32>
    %138 = arith.maximumf %136, %137 : vector<32x8xf32>
    %c0_51 = arith.constant 0 : index
    %c0_52 = arith.constant 0 : index
    %139 = vector.load %arg10[%c0_51, %c0_52] : memref<32x8xf32, #tpu.memory_space<vmem>>, vector<32x8xf32>
    tpu.vector_store %arg10[%c0_51, %c0_52], %138 {strides = array<i32>} : memref<32x8xf32, #tpu.memory_space<vmem>>, vector<32x8xf32>,
    return
  }
}

</mosaic_0001>

<llo_original>
// kernel: residual_block_forward.1
$region0: #{residual_block_forward.1}
  #allocation0 [shape = 'u32[]', space=smem, size = 0x4, offset = 0x4, fixed_abs, tag = 'smem constant byte address 0x4 - core index']
  #allocation1 [shape = 'u32[72,128]{1,0:T(1,128)}', space=vmem, size = 0x9000, scoped, tag = 'internal scratch']
  %s0 = inlined_call_operand.vmem [shape: f32[32,4], index: 0, kind: input, shape index: {}]
  %s1 = inlined_call_operand.vmem [shape: bf16[12,8], index: 1, kind: input, shape index: {}]
  %s2 = inlined_call_operand.vmem [shape: f32[1,8], index: 2, kind: input, shape index: {}]
  %s3 = inlined_call_operand.vmem [shape: f32[1,8], index: 3, kind: input, shape index: {}]
  %s4 = inlined_call_operand.vmem [shape: bf16[24,8], index: 4, kind: input, shape index: {}]
  %s5 = inlined_call_operand.vmem [shape: f32[1,8], index: 5, kind: input, shape index: {}]
  %s6 = inlined_call_operand.vmem [shape: f32[1,8], index: 6, kind: input, shape index: {}]
  %s7 = inlined_call_operand.vmem [shape: bf16[4,8], index: 7, kind: input, shape index: {}]
  %s8 = inlined_call_operand.vmem [shape: f32[1,8], index: 8, kind: input, shape index: {}]
  %s9 = inlined_call_operand.vmem [shape: f32[1,8], index: 9, kind: input, shape index: {}]
  %s10 = inlined_call_operand.vmem [shape: f32[32,8], index: 10, kind: output, shape index: {}]
  %s11 = sld [smem:[#allocation0]]
  $region50: #{residual_block_forward.1} parent=0
    _
  %s13 = ssub.s32 1, %s11
  %s14 = scalar_select 0, %s13, %s11
  // Predicated region
  $region2: #{residual_block_forward.1} parent=0 // pred_check
    _
  $region3: #{residual_block_forward.1} parent=0 // pred_check_branch
    %16 = sbr.rel (0) target = $region5
  $region4: #{residual_block_forward.1} parent=0 // pred_region
    _
  $region5: #{residual_block_forward.1} parent=0 // pred_fallthru
    _
  // Predicated region
  $region6: #{residual_block_forward.1} parent=0 // pred_check
    _
  $region7: #{residual_block_forward.1} parent=0 // pred_check_branch
    %18 = sbr.rel (0) target = $region9
  $region8: #{residual_block_forward.1} parent=0 // pred_region
    _
  $region9: #{residual_block_forward.1} parent=0 // pred_fallthru
    _
  // Predicated region
  $region10: #{residual_block_forward.1} parent=0 // pred_check
    _
  $region11: #{residual_block_forward.1} parent=0 // pred_check_branch
    %20 = sbr.rel (0) target = $region13
  $region12: #{residual_block_forward.1} parent=0 // pred_region
    _
  $region13: #{residual_block_forward.1} parent=0 // pred_fallthru
    _
  // Predicated region
  $region14: #{residual_block_forward.1} parent=0 // pred_check
    _
  $region15: #{residual_block_forward.1} parent=0 // pred_check_branch
    %22 = sbr.rel (0) target = $region17
  $region16: #{residual_block_forward.1} parent=0 // pred_region
    _
  $region17: #{residual_block_forward.1} parent=0 // pred_fallthru
    _
  // Predicated region
  $region18: #{residual_block_forward.1} parent=0 // pred_check
    _
  $region19: #{residual_block_forward.1} parent=0 // pred_check_branch
    %24 = sbr.rel (0) target = $region21
  $region20: #{residual_block_forward.1} parent=0 // pred_region
    _
  $region21: #{residual_block_forward.1} parent=0 // pred_fallthru
    _
  // Predicated region
  $region22: #{residual_block_forward.1} parent=0 // pred_check
    _
  $region23: #{residual_block_forward.1} parent=0 // pred_check_branch
    %26 = sbr.rel (0) target = $region25
  $region24: #{residual_block_forward.1} parent=0 // pred_region
    _
  $region25: #{residual_block_forward.1} parent=0 // pred_fallthru
    _
  // Predicated region
  $region26: #{residual_block_forward.1} parent=0 // pred_check
    _
  $region27: #{residual_block_forward.1} parent=0 // pred_check_branch
    %28 = sbr.rel (0) target = $region29
  $region28: #{residual_block_forward.1} parent=0 // pred_region
    _
  $region29: #{residual_block_forward.1} parent=0 // pred_fallthru
    _
  // Predicated region
  $region30: #{residual_block_forward.1} parent=0 // pred_check
    _
  $region31: #{residual_block_forward.1} parent=0 // pred_check_branch
    %30 = sbr.rel (0) target = $region33
  $region32: #{residual_block_forward.1} parent=0 // pred_region
    _
  $region33: #{residual_block_forward.1} parent=0 // pred_fallthru
    _
  // Predicated region
  $region34: #{residual_block_forward.1} parent=0 // pred_check
    _
  $region35: #{residual_block_forward.1} parent=0 // pred_check_branch
    %32 = sbr.rel (0) target = $region37
  $region36: #{residual_block_forward.1} parent=0 // pred_region
    _
  $region37: #{residual_block_forward.1} parent=0 // pred_fallthru
    _
  // Predicated region
  $region38: #{residual_block_forward.1} parent=0 // pred_check
    _
  $region39: #{residual_block_forward.1} parent=0 // pred_check_branch
    %34 = sbr.rel (0) target = $region41
  $region40: #{residual_block_forward.1} parent=0 // pred_region
    _
  $region41: #{residual_block_forward.1} parent=0 // pred_fallthru
    _
  %v36 = vlaneseq
  %v37 = vshrl.u32 %v36, 7
  %v38 = vadd.s32 %v37, 8
  %v39 = vadd.s32 %v37, 16
  %v40 = vadd.s32 %v37, 24
  %vm41 = vcmp.lt.s32.totalorder %v37, 0
  %v42 = vsub.s32 0, %v37
  %v43 = vsel %vm41, %v42, %v37
  %v44 = vshrl.u32 %v43, 4
  %v45 = vand.u32 %v43, 15
  %v46 = vsub.s32 0, %v45
  %v47 = vsel %vm41, %v46, %v45
  %vm48 = vcmp.lt.s32.totalorder %v38, 0
  %v49 = vsub.s32 0, %v38
  %v50 = vsel %vm48, %v49, %v38
  %v51 = vshrl.u32 %v50, 4
  %v52 = vand.u32 %v50, 15
  %v53 = vsub.s32 0, %v52
  %v54 = vsel %vm48, %v53, %v52
  %vm55 = vcmp.lt.s32.totalorder %v39, 0
  %v56 = vsub.s32 0, %v39
  %v57 = vsel %vm55, %v56, %v39
  %v58 = vshrl.u32 %v57, 4
  %v59 = vand.u32 %v57, 15
  %v60 = vsub.s32 0, %v59
  %v61 = vsel %vm55, %v60, %v59
  %vm62 = vcmp.lt.s32.totalorder %v40, 0
  %v63 = vsub.s32 0, %v40
  %v64 = vsel %vm62, %v63, %v40
  %v65 = vshrl.u32 %v64, 4
  %v66 = vand.u32 %v64, 15
  %v67 = vsub.s32 0, %v66
  %v68 = vsel %vm62, %v67, %v66
  %vm69 = vcmp.ne.s32.totalorder %v47, 0
  %vm70 = vcmp.ne.s32.totalorder %v54, 0
  %vm71 = vcmp.ne.s32.totalorder %v61, 0
  %vm72 = vcmp.ne.s32.totalorder %v68, 0
  %vm73 = vcmp.lt.s32.totalorder %v47, 0
  %vm74 = vcmp.lt.s32.totalorder %v54, 0
  %vm75 = vcmp.lt.s32.totalorder %v61, 0
  %vm76 = vcmp.lt.s32.totalorder %v68, 0
  %vm77 = vmand %vm73, %vm69
  %vm78 = vmand %vm74, %vm70
  %vm79 = vmand %vm75, %vm71
  %vm80 = vmand %vm76, %vm72
  %v81 = vadd.s32 %v47, 16
  %v82 = vadd.s32 %v54, 16
  %v83 = vadd.s32 %v61, 16
  %v84 = vadd.s32 %v68, 16
  %v85 = vsel %vm77, %v81, %v47
  %v86 = vsel %vm78, %v82, %v54
  %v87 = vsel %vm79, %v83, %v61
  %v88 = vsel %vm80, %v84, %v68
  %vm89 = vcmp.ne.s32.totalorder %v85, 0
  %vm90 = vcmp.ne.s32.totalorder %v86, 0
  %vm91 = vcmp.ne.s32.totalorder %v87, 0
  %vm92 = vcmp.ne.s32.totalorder %v88, 0
  %vm93 = vcmp.ne.s32.totalorder %v85, 15
  %vm94 = vcmp.ne.s32.totalorder %v86, 15
  %vm95 = vcmp.ne.s32.totalorder %v87, 15
  %vm96 = vcmp.ne.s32.totalorder %v88, 15
  %v97 = vld [vmem:[%s0] sm:$0xff]
  %v98 = vld [vmem:[%s0 + $0x8] sm:$0xff]
  %v99 = vld [vmem:[%s0 + $0x10] sm:$0xff]
  %v100 = vld [vmem:[%s0 + $0x18] sm:$0xff]
  %vm105 = vcmask 1040384
  %v106 = vrot.slane %v97, 7
  %v107 = vrot.slane %v98, 7
  %v108 = vsel %vm105, %v106, %v107
  %v109 = vrot.slane %v99, 7
  %v110 = vsel %vm105, %v107, %v109
  %v111 = vrot.slane %v100, 7
  %v112 = vsel %vm105, %v109, %v111
  %v117 = vsel %vm105, 0.0, %v106
  %vm118 = vcmask 1046528
  %v119 = vrot.slane %v97, 1
  %v120 = vrot.slane %v98, 1
  %v121 = vsel %vm118, %v119, %v120
  %v122 = vrot.slane %v99, 1
  %v123 = vsel %vm118, %v120, %v122
  %v124 = vrot.slane %v100, 1
  %v125 = vsel %vm118, %v122, %v124
  %v130 = vsel %vm118, %v124, 0.0
  %v131 = vsel %vm89, 1, 0
  %v132 = vsel %vm90, 1, 0
  %v133 = vsel %vm91, 1, 0
  %v134 = vsel %vm92, 1, 0
  %vm135 = vcmp.eq.s32.totalorder %v131, 1
  %vm136 = vcmp.eq.s32.totalorder %v132, 1
  %vm137 = vcmp.eq.s32.totalorder %v133, 1
  %vm138 = vcmp.eq.s32.totalorder %v134, 1
  %v139 = vsel %vm135, %v117, 0.0
  %v140 = vsel %vm136, %v108, 0.0
  %v141 = vsel %vm137, %v110, 0.0
  %v142 = vsel %vm138, %v112, 0.0
  %v143 = vsel %vm93, 1, 0
  %v144 = vsel %vm94, 1, 0
  %v145 = vsel %vm95, 1, 0
  %v146 = vsel %vm96, 1, 0
  %vm147 = vcmp.eq.s32.totalorder %v143, 1
  %vm148 = vcmp.eq.s32.totalorder %v144, 1
  %vm149 = vcmp.eq.s32.totalorder %v145, 1
  %vm150 = vcmp.eq.s32.totalorder %v146, 1
  %v151 = vsel %vm147, %v121, 0.0
  %v152 = vsel %vm148, %v123, 0.0
  %v153 = vsel %vm149, %v125, 0.0
  %v154 = vsel %vm150, %v130, 0.0
  %155 = vrot.lane.b32.xlu0 %v97, 4
  %v156 = vpop.permute.xlu0 %155
  %157 = vrot.lane.b32.xlu0 %v98, 4
  %v158 = vpop.permute.xlu0 %157
  %159 = vrot.lane.b32.xlu0 %v99, 4
  %v160 = vpop.permute.xlu0 %159
  %161 = vrot.lane.b32.xlu0 %v100, 4
  %v162 = vpop.permute.xlu0 %161
  %171 = vrot.lane.b32.xlu0 %v151, 8
  %v172 = vpop.permute.xlu0 %171
  %173 = vrot.lane.b32.xlu0 %v152, 8
  %v174 = vpop.permute.xlu0 %173
  %175 = vrot.lane.b32.xlu0 %v153, 8
  %v176 = vpop.permute.xlu0 %175
  %177 = vrot.lane.b32.xlu0 %v154, 8
  %v178 = vpop.permute.xlu0 %177
  %vm183 = vcmask 31744
  %v184 = vsel %vm183, %v139, %v156
  %v185 = vsel %vm183, %v140, %v158
  %v186 = vsel %vm183, %v141, %v160
  %v187 = vsel %vm183, %v142, %v162
  %vm188 = vcmask 64512
  %v189 = vsel %vm188, %v184, %v172
  %v190 = vsel %vm188, %v185, %v174
  %v191 = vsel %vm188, %v186, %v176
  %v192 = vsel %vm188, %v187, %v178
  %v193 = vpack.c.bf16 %v190, %v189
  %v194 = vpack.c.bf16 %v192, %v191
  %v195 = vld [vmem:[%s1] sm:$0xf]
  %v196 = vld [vmem:[%s1 + $0x4] sm:$0x3]
  %v199 = vunpack.c.l.b16 %v195
  %v200 = vunpack.c.l.b16 %v196
  %v201 = vpack.c.b16 %v200, %v199
  %vm202 = vcmask 97280
  %v204 = vsel %vm202, %v193, 0
  %v207 = vsel %vm202, %v194, 0
  %vm209 = vcmask 1045504
  %v211 = vsel %vm209, %v201, 0
  %213 = vmatpush.bf16.msra.mxu0 0
  %214 = vmatpush.bf16.msra.mxu0 0
  %215 = vmatpush.bf16.msra.mxu0 0
  %216 = vmatpush.bf16.msra.mxu0 0
  %217 = vmatpush.bf16.msra.mxu0 0
  %218 = vmatpush.bf16.msra.mxu0 0
  %219 = vmatpush.bf16.msra.mxu0 0
  %220 = vmatpush.bf16.msra.mxu0 %v211
  %221 = vmatmul.bf16.gmra.mxu0 %v204
  %v222 = vpop.f32.mrf.mxu0
  %v223 = vadd.f32 0.0, %v222
  %v224 = vpop.f32.mrf.mxu0
  %v225 = vadd.f32 0.0, %v224
  %226 = vmatmul.bf16.gmra.mxu0 %v207
  %v227 = vpop.f32.mrf.mxu0
  %v228 = vadd.f32 0.0, %v227
  %v229 = vpop.f32.mrf.mxu0
  %v230 = vadd.f32 0.0, %v229
  %231 = vdwg.mxu0
  %v232 = vsel %vm188, %v223, 0.0
  %v233 = vsel %vm188, %v225, 0.0
  %v234 = vadd.f32 %v232, %v233
  %v235 = vsel %vm188, %v228, 0.0
  %v236 = vadd.f32 %v234, %v235
  %v237 = vsel %vm188, %v230, 0.0
  %v238 = vadd.f32 %v236, %v237
  %v239 = vrot.slane %v238, 4
  %v240 = vadd.f32 %v238, %v239
  %v241 = vrot.slane %v240, 2
  %v242 = vadd.f32 %v240, %v241
  %v243 = vrot.slane %v242, 1
  %v244 = vadd.f32 %v242, %v243
  %v245 = vmul.f32 %v244, 0.03125
  %v246 = vmul.f32 %v223, %v223
  %v247 = vmul.f32 %v225, %v225
  %v248 = vmul.f32 %v228, %v228
  %v249 = vmul.f32 %v230, %v230
  %v250 = vsel %vm188, %v246, 0.0
  %v251 = vsel %vm188, %v247, 0.0
  %v252 = vadd.f32 %v250, %v251
  %v253 = vsel %vm188, %v248, 0.0
  %v254 = vadd.f32 %v252, %v253
  %v255 = vsel %vm188, %v249, 0.0
  %v256 = vadd.f32 %v254, %v255
  %v257 = vrot.slane %v256, 4
  %v258 = vadd.f32 %v256, %v257
  %v259 = vrot.slane %v258, 2
  %v260 = vadd.f32 %v258, %v259
  %v261 = vrot.slane %v260, 1
  %v262 = vadd.f32 %v260, %v261
  %v263 = vmul.f32 %v262, 0.03125
  %v264 = vmul.f32 %v245, %v245
  %v265 = vsub.f32 %v263, %v264
  %v266 = vmax.f32 %v265, 0.0
  %v267 = vld [vmem:[%s2] sm:$0x1]
  %v268 = vadd.f32 %v266, 1e-05
  %v269 = vrsqrt.pop %v268
  %v270 = vmul.f32 %v269, %v268
  %v271 = vmul.f32 %v270, %v269
  %v272 = vmul.f32 0.5, %v271
  %v273 = vsub.f32 1.5, %v272
  %v274 = vmul.f32 %v269, %v273
  %vm275 = vweird.f32 %v268
  %vm276 = vweird.f32 %v269
  %vm277 = vmor %vm275, %vm276
  %v278 = vsel %vm277, %v269, %v274
  %v279 = vmul.f32 %v267, %v278
  %v280 = vld [vmem:[%s3] sm:$0x1]
  %v281 = vmul.f32 %v245, %v279
  %v282 = vsub.f32 %v280, %v281
  %v284 = vperm.slane %v279, 0
  %v286 = vmul.f32 %v223, %v284
  %v287 = vmul.f32 %v225, %v284
  %v288 = vmul.f32 %v228, %v284
  %v289 = vmul.f32 %v230, %v284
  %v291 = vperm.slane %v282, 0
  %v293 = vadd.f32 %v286, %v291
  %v294 = vadd.f32 %v287, %v291
  %v295 = vadd.f32 %v288, %v291
  %v296 = vadd.f32 %v289, %v291
  %v297 = vmax.f32 %v293, 0.0
  %v298 = vmax.f32 %v294, 0.0
  %v299 = vmax.f32 %v295, 0.0
  %v300 = vmax.f32 %v296, 0.0
  %v305 = vrot.slane %v297, 7
  %v306 = vrot.slane %v298, 7
  %v307 = vsel %vm105, %v305, %v306
  %v308 = vrot.slane %v299, 7
  %v309 = vsel %vm105, %v306, %v308
  %v310 = vrot.slane %v300, 7
  %v311 = vsel %vm105, %v308, %v310
  %v316 = vsel %vm105, 0.0, %v305
  %v317 = vrot.slane %v297, 1
  %v318 = vrot.slane %v298, 1
  %v319 = vsel %vm118, %v317, %v318
  %v320 = vrot.slane %v299, 1
  %v321 = vsel %vm118, %v318, %v320
  %v322 = vrot.slane %v300, 1
  %v323 = vsel %vm118, %v320, %v322
  %v328 = vsel %vm118, %v322, 0.0
  %v329 = vsel %vm135, %v316, 0.0
  %v330 = vsel %vm136, %v307, 0.0
  %v331 = vsel %vm137, %v309, 0.0
  %v332 = vsel %vm138, %v311, 0.0
  %v333 = vsel %vm147, %v319, 0.0
  %v334 = vsel %vm148, %v321, 0.0
  %v335 = vsel %vm149, %v323, 0.0
  %v336 = vsel %vm150, %v328, 0.0
  %337 = vrot.lane.b32.xlu0 %v297, 8
  %v338 = vpop.permute.xlu0 %337
  %339 = vrot.lane.b32.xlu0 %v298, 8
  %v340 = vpop.permute.xlu0 %339
  %341 = vrot.lane.b32.xlu0 %v299, 8
  %v342 = vpop.permute.xlu0 %341
  %343 = vrot.lane.b32.xlu0 %v300, 8
  %v344 = vpop.permute.xlu0 %343
  %353 = vrot.lane.b32.xlu0 %v333, 16
  %v354 = vpop.permute.xlu0 %353
  %355 = vrot.lane.b32.xlu0 %v334, 16
  %v356 = vpop.permute.xlu0 %355
  %357 = vrot.lane.b32.xlu0 %v335, 16
  %v358 = vpop.permute.xlu0 %357
  %359 = vrot.lane.b32.xlu0 %v336, 16
  %v360 = vpop.permute.xlu0 %359
  %v365 = vsel %vm188, %v329, %v338
  %v366 = vsel %vm188, %v330, %v340
  %v367 = vsel %vm188, %v331, %v342
  %v368 = vsel %vm188, %v332, %v344
  %vm369 = vcmask 130048
  %v370 = vsel %vm369, %v365, %v354
  %v371 = vsel %vm369, %v366, %v356
  %v372 = vsel %vm369, %v367, %v358
  %v373 = vsel %vm369, %v368, %v360
  %v374 = vpack.c.bf16 %v371, %v370
  %v375 = vpack.c.bf16 %v373, %v372
  %v376 = vld [vmem:[%s4] sm:$0xf]
  %v377 = vld [vmem:[%s4 + $0x4] sm:$0xf]
  %v378 = vld [vmem:[%s4 + $0x8] sm:$0xf]
  %v382 = vunpack.c.l.b16 %v376
  %v383 = vunpack.c.l.b16 %v377
  %v384 = vunpack.c.l.b16 %v378
  %v385 = vpack.c.b16 %v383, %v382
  %v386 = vpack.c.b16 %v384, %v384
  %vm388 = vcmask 195584
  %v390 = vsel %vm388, %v374, 0
  %v393 = vsel %vm388, %v375, 0
  %vm395 = vcmask 1043456
  %v397 = vsel %vm395, %v386, 0
  %399 = vmatpush.bf16.msra.mxu0 0
  %400 = vmatpush.bf16.msra.mxu0 0
  %401 = vmatpush.bf16.msra.mxu0 0
  %402 = vmatpush.bf16.msra.mxu0 0
  %403 = vmatpush.bf16.msra.mxu0 0
  %404 = vmatpush.bf16.msra.mxu0 0
  %405 = vmatpush.bf16.msra.mxu0 %v397
  %406 = vmatpush.bf16.msra.mxu0 %v385
  %407 = vmatmul.bf16.gmra.mxu0 %v390
  %v408 = vpop.f32.mrf.mxu0
  %v409 = vadd.f32 0.0, %v408
  %v410 = vpop.f32.mrf.mxu0
  %v411 = vadd.f32 0.0, %v410
  %412 = vmatmul.bf16.gmra.mxu0 %v393
  %v413 = vpop.f32.mrf.mxu0
  %v414 = vadd.f32 0.0, %v413
  %v415 = vpop.f32.mrf.mxu0
  %v416 = vadd.f32 0.0, %v415
  %417 = vdwg.mxu0
  %v418 = vsel %vm188, %v409, 0.0
  %v419 = vsel %vm188, %v411, 0.0
  %v420 = vadd.f32 %v418, %v419
  %v421 = vsel %vm188, %v414, 0.0
  %v422 = vadd.f32 %v420, %v421
  %v423 = vsel %vm188, %v416, 0.0
  %v424 = vadd.f32 %v422, %v423
  %v425 = vrot.slane %v424, 4
  %v426 = vadd.f32 %v424, %v425
  %v427 = vrot.slane %v426, 2
  %v428 = vadd.f32 %v426, %v427
  %v429 = vrot.slane %v428, 1
  %v430 = vadd.f32 %v428, %v429
  %v431 = vmul.f32 %v430, 0.03125
  %v432 = vmul.f32 %v409, %v409
  %v433 = vmul.f32 %v411, %v411
  %v434 = vmul.f32 %v414, %v414
  %v435 = vmul.f32 %v416, %v416
  %v436 = vsel %vm188, %v432, 0.0
  %v437 = vsel %vm188, %v433, 0.0
  %v438 = vadd.f32 %v436, %v437
  %v439 = vsel %vm188, %v434, 0.0
  %v440 = vadd.f32 %v438, %v439
  %v441 = vsel %vm188, %v435, 0.0
  %v442 = vadd.f32 %v440, %v441
  %v443 = vrot.slane %v442, 4
  %v444 = vadd.f32 %v442, %v443
  %v445 = vrot.slane %v444, 2
  %v446 = vadd.f32 %v444, %v445
  %v447 = vrot.slane %v446, 1
  %v448 = vadd.f32 %v446, %v447
  %v449 = vmul.f32 %v448, 0.03125
  %v450 = vmul.f32 %v431, %v431
  %v451 = vsub.f32 %v449, %v450
  %v452 = vmax.f32 %v451, 0.0
  %v453 = vld [vmem:[%s5] sm:$0x1]
  %v454 = vadd.f32 %v452, 1e-05
  %v455 = vrsqrt.pop %v454
  %v456 = vmul.f32 %v455, %v454
  %v457 = vmul.f32 %v456, %v455
  %v458 = vmul.f32 0.5, %v457
  %v459 = vsub.f32 1.5, %v458
  %v460 = vmul.f32 %v455, %v459
  %vm461 = vweird.f32 %v454
  %vm462 = vweird.f32 %v455
  %vm463 = vmor %vm461, %vm462
  %v464 = vsel %vm463, %v455, %v460
  %v465 = vmul.f32 %v453, %v464
  %v466 = vld [vmem:[%s6] sm:$0x1]
  %v467 = vmul.f32 %v431, %v465
  %v468 = vsub.f32 %v466, %v467
  %v470 = vperm.slane %v465, 0
  %v472 = vmul.f32 %v409, %v470
  %v473 = vmul.f32 %v411, %v470
  %v474 = vmul.f32 %v414, %v470
  %v475 = vmul.f32 %v416, %v470
  %v477 = vperm.slane %v468, 0
  %v479 = vadd.f32 %v472, %v477
  %v480 = vadd.f32 %v473, %v477
  %v481 = vadd.f32 %v474, %v477
  %v482 = vadd.f32 %v475, %v477
  %v483 = vpack.c.bf16 %v98, %v97
  %v484 = vpack.c.bf16 %v100, %v99
  %v485 = vld [vmem:[%s7] sm:$0x3]
  %v487 = vsel %vm183, %v483, 0
  %v490 = vsel %vm183, %v484, 0
  %vm492 = vcmask 1041408
  %v494 = vsel %vm492, %v485, 0
  %496 = vmatpush.bf16.msra.mxu0 0
  %497 = vmatpush.bf16.msra.mxu0 0
  %498 = vmatpush.bf16.msra.mxu0 0
  %499 = vmatpush.bf16.msra.mxu0 0
  %500 = vmatpush.bf16.msra.mxu0 0
  %501 = vmatpush.bf16.msra.mxu0 0
  %502 = vmatpush.bf16.msra.mxu0 0
  %503 = vmatpush.bf16.msra.mxu0 %v494
  %504 = vmatmul.bf16.gmra.mxu0 %v487
  %v505 = vpop.f32.mrf.mxu0
  %v506 = vadd.f32 0.0, %v505
  %v507 = vpop.f32.mrf.mxu0
  %v508 = vadd.f32 0.0, %v507
  %509 = vmatmul.bf16.gmra.mxu0 %v490
  %v510 = vpop.f32.mrf.mxu0
  %v511 = vadd.f32 0.0, %v510
  %v512 = vpop.f32.mrf.mxu0
  %v513 = vadd.f32 0.0, %v512
  %514 = vdwg.mxu0
  %v515 = vsel %vm188, %v506, 0.0
  %v516 = vsel %vm188, %v508, 0.0
  %v517 = vadd.f32 %v515, %v516
  %v518 = vsel %vm188, %v511, 0.0
  %v519 = vadd.f32 %v517, %v518
  %v520 = vsel %vm188, %v513, 0.0
  %v521 = vadd.f32 %v519, %v520
  %v522 = vrot.slane %v521, 4
  %v523 = vadd.f32 %v521, %v522
  %v524 = vrot.slane %v523, 2
  %v525 = vadd.f32 %v523, %v524
  %v526 = vrot.slane %v525, 1
  %v527 = vadd.f32 %v525, %v526
  %v528 = vmul.f32 %v527, 0.03125
  %v529 = vmul.f32 %v506, %v506
  %v530 = vmul.f32 %v508, %v508
  %v531 = vmul.f32 %v511, %v511
  %v532 = vmul.f32 %v513, %v513
  %v533 = vsel %vm188, %v529, 0.0
  %v534 = vsel %vm188, %v530, 0.0
  %v535 = vadd.f32 %v533, %v534
  %v536 = vsel %vm188, %v531, 0.0
  %v537 = vadd.f32 %v535, %v536
  %v538 = vsel %vm188, %v532, 0.0
  %v539 = vadd.f32 %v537, %v538
  %v540 = vrot.slane %v539, 4
  %v541 = vadd.f32 %v539, %v540
  %v542 = vrot.slane %v541, 2
  %v543 = vadd.f32 %v541, %v542
  %v544 = vrot.slane %v543, 1
  %v545 = vadd.f32 %v543, %v544
  %v546 = vmul.f32 %v545, 0.03125
  %v547 = vmul.f32 %v528, %v528
  %v548 = vsub.f32 %v546, %v547
  %v549 = vmax.f32 %v548, 0.0
  %v550 = vld [vmem:[%s8] sm:$0x1]
  %v551 = vadd.f32 %v549, 1e-05
  %v552 = vrsqrt.pop %v551
  %v553 = vmul.f32 %v552, %v551
  %v554 = vmul.f32 %v553, %v552
  %v555 = vmul.f32 0.5, %v554
  %v556 = vsub.f32 1.5, %v555
  %v557 = vmul.f32 %v552, %v556
  %vm558 = vweird.f32 %v551
  %vm559 = vweird.f32 %v552
  %vm560 = vmor %vm558, %vm559
  %v561 = vsel %vm560, %v552, %v557
  %v562 = vmul.f32 %v550, %v561
  %v563 = vld [vmem:[%s9] sm:$0x1]
  %v564 = vmul.f32 %v528, %v562
  %v565 = vsub.f32 %v563, %v564
  %v567 = vperm.slane %v562, 0
  %v569 = vmul.f32 %v506, %v567
  %v570 = vmul.f32 %v508, %v567
  %v571 = vmul.f32 %v511, %v567
  %v572 = vmul.f32 %v513, %v567
  %v574 = vperm.slane %v565, 0
  %v576 = vadd.f32 %v569, %v574
  %v577 = vadd.f32 %v570, %v574
  %v578 = vadd.f32 %v571, %v574
  %v579 = vadd.f32 %v572, %v574
  %v580 = vadd.f32 %v479, %v576
  %v581 = vadd.f32 %v480, %v577
  %v582 = vadd.f32 %v481, %v578
  %v583 = vadd.f32 %v482, %v579
  %v584 = vmax.f32 %v580, 0.0
  %v585 = vmax.f32 %v581, 0.0
  %v586 = vmax.f32 %v582, 0.0
  %v587 = vmax.f32 %v583, 0.0
  %588 = vst.msk [vmem:[%s10] sm:$0xff] %vm188, %v584
  %589 = vst.msk [vmem:[%s10 + $0x8] sm:$0xff] %vm188, %v585
  %590 = vst.msk [vmem:[%s10 + $0x10] sm:$0xff] %vm188, %v586
  %591 = vst.msk [vmem:[%s10 + $0x18] sm:$0xff] %vm188, %v587
  // Predicated region
  $region42: #{residual_block_forward.1} parent=0 // pred_check
    _
  $region43: #{residual_block_forward.1} parent=0 // pred_check_branch
    %593 = sbr.rel (0) target = $region45
  $region44: #{residual_block_forward.1} parent=0 // pred_region
    _
  $region45: #{residual_block_forward.1} parent=0 // pred_fallthru
    _
  // Predicated region
  $region46: #{residual_block_forward.1} parent=0 // pred_check
    _
  $region47: #{residual_block_forward.1} parent=0 // pred_check_branch
    %595 = sbr.rel (0) target = $region49
  $region48: #{residual_block_forward.1} parent=0 // pred_region
    _
  $region49: #{residual_block_forward.1} parent=0 // pred_fallthru
    _

</llo_original>
